<compile_context>
chip_gen: v5e
topology: v5e:2x2
jax: 0.10.0
libtpu: 0.0.40
codegen_flags: <defaults>
</compile_context>

<pallas_src>
import jax
import jax.numpy as jnp
from jax.experimental import pallas as pl
from jax.experimental.pallas import tpu as pltpu

_LANE = 128
_SUBLANE = 8


def _round_up(x, m):
    return ((x + m - 1) // m) * m


# ----------------------------------------------------------------------------
# Kernel: fused-encoder layer 1 (two dots, no concat) -> ReLU ->
#         (enc layer 2 ∘ classifier layer 1) fused dot -> ReLU ->
#         classifier layer 2 -> unpadded store.
# ----------------------------------------------------------------------------
def _joint_discrim_kernel(
    x1_ref, x2_ref,              # (TB, D1) / (TB, D2), bf16 batch tiles
    w1a_ref, w1b_ref, b1_ref,    # layer-1 weights (split block-diag) + bias
    wf_ref, bf_ref,              # fused (enc L2 @ classifier L1) + bias
    w2_ref, b2_ref,              # classifier L2 (lane-padded to 128) + bias
    out_ref,                     # (TB, num_labels)  -- unpadded f32 output
):
    f32 = jnp.float32
    cdt = w1a_ref.dtype          # compute (MXU operand) dtype: bf16

    # ---- frozen encoders, layer 1 (torch.no_grad() region) ----------------
    # [x1|x2] @ blockdiag(e1_w1, e2_w1) == x1 @ [e1_w1|0] + x2 @ [0|e2_w1]
    # -> h is already [enc1_hidden | enc2_hidden]; no lane-axis concatenate.
    h = jnp.dot(x1_ref[...], w1a_ref[...], preferred_element_type=f32)
    h = h + jnp.dot(x2_ref[...], w1b_ref[...], preferred_element_type=f32)
    h = jnp.maximum(h + b1_ref[...], 0.0)                      # f32 bias+ReLU

    # ---- encoder layer 2 fused with classifier layer 1 --------------------
    c = jnp.dot(h.astype(cdt), wf_ref[...], preferred_element_type=f32)
    c = jnp.maximum(c + bf_ref[...], 0.0)

    # ---- classifier layer 2 ------------------------------------------------
    # Weights lane-padded to 128 for the MXU; only the first num_labels
    # columns are written back (masked store, unpadded HBM traffic).
    logits = jnp.dot(c.astype(cdt), w2_ref[...], preferred_element_type=f32)
    logits = logits + b2_ref[...]
    out_ref[...] = logits[:, : out_ref.shape[-1]].astype(out_ref.dtype)


# ----------------------------------------------------------------------------
# Host-side packing of the frozen module parameters (done once).
# ----------------------------------------------------------------------------
def pack_params(p, *, compute_dtype=jnp.bfloat16):
    """Fuse the frozen encoders (and encoder L2 with classifier L1) host-side,
    cast matmul operands to bf16, pad classifier output width to 128 lanes."""
    d1, h1 = p["e1_w1"].shape
    d2, h2 = p["e2_w1"].shape
    l1 = p["e1_w2"].shape[1]
    l2 = p["e2_w2"].shape[1]
    H = h1 + h2

    # Layer-1 weights, split per input (rows of the block-diagonal matrix):
    w1a = jnp.zeros((d1, H), jnp.float32).at[:, :h1].set(p["e1_w1"])
    w1b = jnp.zeros((d2, H), jnp.float32).at[:, h1:].set(p["e2_w1"])
    b1 = jnp.concatenate([p["e1_b1"], p["e2_b1"]], axis=-1)          # (1, H)

    # Encoder layer 2 (block-diag) fused with classifier layer 1 — exact,
    # because there is no nonlinearity between `combined` and classifier L1.
    w_enc2 = jnp.zeros((H, l1 + l2), jnp.float32)
    w_enc2 = w_enc2.at[:h1, :l1].set(p["e1_w2"]).at[h1:, l1:].set(p["e2_w2"])
    b_enc2 = jnp.concatenate([p["e1_b2"], p["e2_b2"]], axis=-1)      # (1, l1+l2)
    wf = w_enc2 @ p["c_w1"]                                          # (H, hidden)
    bf = b_enc2 @ p["c_w1"] + p["c_b1"]                              # (1, hidden)

    # Classifier layer 2: pad output width to 128 lanes for the MXU only
    # (the HBM output writeback stays unpadded).
    hid, n_lab = p["c_w2"].shape
    n_pad = _round_up(n_lab, _LANE)
    w2 = jnp.zeros((hid, n_pad), jnp.float32).at[:, :n_lab].set(p["c_w2"])
    b2 = jnp.zeros((1, n_pad), jnp.float32).at[:, :n_lab].set(p["c_b2"])

    return dict(
        w1a=w1a.astype(compute_dtype), w1b=w1b.astype(compute_dtype),
        b1=b1.astype(jnp.float32),
        wf=wf.astype(compute_dtype), bf=bf.astype(jnp.float32),
        w2=w2.astype(compute_dtype), b2=b2.astype(jnp.float32),
        num_labels=n_lab,
    )


# ----------------------------------------------------------------------------
# Wrapper: batch-tiled pallas_call.
# ----------------------------------------------------------------------------
def pretrained_joint_discrim_forward(x1, x2, packed, *, batch_tile=512):
    B = x1.shape[0]
    d1 = x1.shape[-1]
    d2 = x2.shape[-1]
    n_lab = int(packed["num_labels"])

    cdt = packed["w1a"].dtype
    x1 = x1.astype(cdt)
    x2 = x2.astype(cdt)

    # Batch tile: sublane-aligned, capped by the aligned batch size.
    b_aligned = _round_up(max(B, 1), _SUBLANE)
    tb = min(_round_up(int(batch_tile), _SUBLANE), b_aligned)
    # v7x megacore: make the "parallel" grid axis have >= 2 blocks whenever the
    # batch is big enough so both TensorCores get work.
    if b_aligned >= 2 * _SUBLANE and b_aligned // tb < 2:
        tb = _round_up((b_aligned + 1) // 2, _SUBLANE)
    b_pad = _round_up(B, tb)
    if b_pad != B:
        x1 = jnp.pad(x1, ((0, b_pad - B), (0, 0)))
        x2 = jnp.pad(x2, ((0, b_pad - B), (0, 0)))

    grid = (b_pad // tb,)

    weight_names = ["w1a", "w1b", "b1", "wf", "bf", "w2", "b2"]
    weights = [packed[k] for k in weight_names]

    x1_spec = pl.BlockSpec((tb, d1), lambda i: (i, 0))
    x2_spec = pl.BlockSpec((tb, d2), lambda i: (i, 0))
    const_map = lambda i: (0, 0)              # weights: DMA once, VMEM-resident
    w_specs = [pl.BlockSpec(tuple(w.shape), const_map) for w in weights]
    out_spec = pl.BlockSpec((tb, n_lab), lambda i: (i, 0))

    H = packed["w1a"].shape[1]
    hidden = packed["wf"].shape[1]
    n_pad_mxu = packed["w2"].shape[1]

    flops = 2 * b_pad * (d1 * H + d2 * H + H * hidden + hidden * n_pad_mxu)
    weight_bytes = sum(int(w.size) * w.dtype.itemsize for w in weights)
    bytes_accessed = (x1.dtype.itemsize * b_pad * (d1 + d2)   # bf16 x reads
                      + 4 * b_pad * n_lab                      # unpadded f32 out
                      + weight_bytes)

    # VMEM budget: double-buffered x/out tiles + f32 activations + weights.
    est_vmem = (2 * x1.dtype.itemsize * 2 * tb * (d1 + d2)
                + 2 * 4 * tb * n_lab
                + 4 * tb * (H + hidden + n_pad_mxu)
                + 2 * weight_bytes)
    compiler_kwargs = dict(dimension_semantics=("parallel",))   # megacore on v7x
    if est_vmem > (16 << 20):
        # Cap well below v7x's 64 MiB physical VMEM per TensorCore.
        compiler_kwargs["vmem_limit_bytes"] = min(
            _round_up(2 * est_vmem, 1 << 20), 48 << 20)

    out = pl.pallas_call(
        _joint_discrim_kernel,
        out_shape=jax.ShapeDtypeStruct((b_pad, n_lab), jnp.float32),
        grid=grid,
        in_specs=[x1_spec, x2_spec] + w_specs,
        out_specs=out_spec,
        compiler_params=pltpu.CompilerParams(**compiler_kwargs),
        cost_estimate=pl.CostEstimate(flops=flops, transcendentals=0,
                                      bytes_accessed=bytes_accessed),
    )(x1, x2, *weights)

    # Slice off the batch padding (feature dim is already unpadded).
    return out[:B]


# ----------------------------------------------------------------------------
# Synthetic deterministic parameters + pure-JAX f32 reference (unfused).
# ----------------------------------------------------------------------------
def _init_linear(key, d_in, d_out, scale=0.1):
    kw, kb = jax.random.split(key)
    w = scale * jax.random.normal(kw, (d_in, d_out), dtype=jnp.float32)
    b = scale * jax.random.normal(kb, (1, d_out), dtype=jnp.float32)
    return w, b


def make_params(key, d1, d2, enc1_hidden, enc2_hidden, latent1, latent2,
                hidden_dim, num_labels):
    keys = jax.random.split(key, 6)
    e1_w1, e1_b1 = _init_linear(keys[0], d1, enc1_hidden)
    e1_w2, e1_b2 = _init_linear(keys[1], enc1_hidden, latent1)
    e2_w1, e2_b1 = _init_linear(keys[2], d2, enc2_hidden)
    e2_w2, e2_b2 = _init_linear(keys[3], enc2_hidden, latent2)
    combined_dim = latent1 + latent2
    c_w1, c_b1 = _init_linear(keys[4], combined_dim, hidden_dim)
    c_w2, c_b2 = _init_linear(keys[5], hidden_dim, num_labels)
    return dict(
        e1_w1=e1_w1, e1_b1=e1_b1, e1_w2=e1_w2, e1_b2=e1_b2,
        e2_w1=e2_w1, e2_b1=e2_b1, e2_w2=e2_w2, e2_b2=e2_b2,
        c_w1=c_w1, c_b1=c_b1, c_w2=c_w2, c_b2=c_b2,
    )


def reference_forward(x1, x2, p):
    relu = lambda v: jnp.maximum(v, 0.0)
    enc1 = relu(x1 @ p["e1_w1"] + p["e1_b1"]) @ p["e1_w2"] + p["e1_b2"]
    enc2 = relu(x2 @ p["e2_w1"] + p["e2_b1"]) @ p["e2_w2"] + p["e2_b2"]
    combined = jnp.concatenate([enc1, enc2], axis=-1)
    return relu(combined @ p["c_w1"] + p["c_b1"]) @ p["c_w2"] + p["c_b2"]


if __name__ == "__main__":
    key = jax.random.PRNGKey(0)
    k_x1, k_x2, k_p = jax.random.split(key, 3)

    # Small shapes consistent with the module: batch=2, input dims 16/12,
    # encoder hiddens 32/32, latents 16/16 -> combined 32, classifier
    # hidden_dim=64 (module default), num_labels=3.
    B, D1, D2 = 2, 16, 12
    ENC1_H, ENC2_H = 32, 32
    LAT1, LAT2 = 16, 16
    HIDDEN, NUM_LABELS = 64, 3

    x1 = jax.random.normal(k_x1, (B, D1), dtype=jnp.float32)
    x2 = jax.random.normal(k_x2, (B, D2), dtype=jnp.float32)
    params = make_params(k_p, D1, D2, ENC1_H, ENC2_H, LAT1, LAT2, HIDDEN, NUM_LABELS)

    packed = pack_params(params)   # done once: encoders are frozen
    logits = pretrained_joint_discrim_forward(x1, x2, packed)
    logits = jax.block_until_ready(logits)

    ref = reference_forward(x1, x2, params)
    assert logits.shape == (B, NUM_LABELS)
    # bf16 matmul operands (f32 accumulation) -> loose but safe tolerance
    # against the pure-f32 reference.
    max_err = float(jnp.max(jnp.abs(logits - ref)))
    assert jnp.allclose(logits, ref, atol=3e-2, rtol=3e-2), max_err

    print("KERNEL_OK")
</pallas_src>

<mosaic_0001>
module attributes {stable_mosaic.version = 11 : i64} {
  func.func @_joint_discrim_kernel(%arg0: i32, %arg1: memref<8x16xbf16, #tpu.memory_space<vmem>>, %arg2: memref<8x12xbf16, #tpu.memory_space<vmem>>, %arg3: memref<16x64xbf16, #tpu.memory_space<vmem>>, %arg4: memref<12x64xbf16, #tpu.memory_space<vmem>>, %arg5: memref<1x64xf32, #tpu.memory_space<vmem>>, %arg6: memref<64x64xbf16, #tpu.memory_space<vmem>>, %arg7: memref<1x64xf32, #tpu.memory_space<vmem>>, %arg8: memref<64x128xbf16, #tpu.memory_space<vmem>>, %arg9: memref<1x128xf32, #tpu.memory_space<vmem>>, %arg10: memref<8x3xf32, #tpu.memory_space<vmem>>) attributes {dimension_semantics = [#tpu.dimension_semantics<parallel>], iteration_bounds = array<i64: 1>, scalar_prefetch = 0 : i64, scratch_operands = 0 : i64, tpu.core_type = #tpu.core_type<tc>, window_params = [{transform_indices = @transform_0, window_bounds = array<i64: 8, 16>}, {transform_indices = @transform_1, window_bounds = array<i64: 8, 12>}, {pipeline_mode = #tpu.pipeline_mode<synchronous>, transform_indices = @transform_2, window_bounds = array<i64: 16, 64>}, {pipeline_mode = #tpu.pipeline_mode<synchronous>, transform_indices = @transform_3, window_bounds = array<i64: 12, 64>}, {pipeline_mode = #tpu.pipeline_mode<synchronous>, transform_indices = @transform_4, window_bounds = array<i64: 1, 64>}, {pipeline_mode = #tpu.pipeline_mode<synchronous>, transform_indices = @transform_5, window_bounds = array<i64: 64, 64>}, {pipeline_mode = #tpu.pipeline_mode<synchronous>, transform_indices = @transform_6, window_bounds = array<i64: 1, 64>}, {pipeline_mode = #tpu.pipeline_mode<synchronous>, transform_indices = @transform_7, window_bounds = array<i64: 64, 128>}, {pipeline_mode = #tpu.pipeline_mode<synchronous>, transform_indices = @transform_8, window_bounds = array<i64: 1, 128>}, {transform_indices = @transform_9, window_bounds = array<i64: 8, 3>}]} {
    %c0 = arith.constant 0 : index
    %c0_0 = arith.constant 0 : index
    %0 = vector.load %arg1[%c0, %c0_0] : memref<8x16xbf16, #tpu.memory_space<vmem>>, vector<8x16xbf16>
    %c0_1 = arith.constant 0 : index
    %c0_2 = arith.constant 0 : index
    %1 = vector.load %arg3[%c0_1, %c0_2] : memref<16x64xbf16, #tpu.memory_space<vmem>>, vector<16x64xbf16>
    %cst = arith.constant dense<0.000000e+00> : vector<8x64xf32>
    %2 = tpu.matmul %0, %1, %cst {dimension_numbers = #tpu.dot_dimension_numbers<[1], [0], [0], [1], [0, 0, 1, 1], [], []>} : vector<8x16xbf16>, vector<16x64xbf16>, vector<8x64xf32> -> vector<8x64xf32>
    %c0_3 = arith.constant 0 : index
    %c0_4 = arith.constant 0 : index
    %3 = vector.load %arg2[%c0_3, %c0_4] : memref<8x12xbf16, #tpu.memory_space<vmem>>, vector<8x12xbf16>
    %c0_5 = arith.constant 0 : index
    %c0_6 = arith.constant 0 : index
    %4 = vector.load %arg4[%c0_5, %c0_6] : memref<12x64xbf16, #tpu.memory_space<vmem>>, vector<12x64xbf16>
    %cst_7 = arith.constant dense<0.000000e+00> : vector<8x64xf32>
    %5 = tpu.matmul %3, %4, %cst_7 {dimension_numbers = #tpu.dot_dimension_numbers<[1], [0], [0], [1], [0, 0, 1, 1], [], []>} : vector<8x12xbf16>, vector<12x64xbf16>, vector<8x64xf32> -> vector<8x64xf32>
    %6 = arith.addf %2, %5 : vector<8x64xf32>
    %c0_8 = arith.constant 0 : index
    %c0_9 = arith.constant 0 : index
    %7 = vector.load %arg5[%c0_8, %c0_9] : memref<1x64xf32, #tpu.memory_space<vmem>>, vector<1x64xf32>
    %8 = vector.broadcast %7 : vector<1x64xf32> to vector<8x64xf32>
    %9 = arith.addf %6, %8 : vector<8x64xf32>
    %cst_10 = arith.constant 0.000000e+00 : f32
    %10 = vector.broadcast %cst_10 : f32 to vector<8x64xf32>
    %11 = arith.maximumf %9, %10 : vector<8x64xf32>
    %12 = arith.truncf %11 : vector<8x64xf32> to vector<8x64xbf16>
    %c0_11 = arith.constant 0 : index
    %c0_12 = arith.constant 0 : index
    %13 = vector.load %arg6[%c0_11, %c0_12] : memref<64x64xbf16, #tpu.memory_space<vmem>>, vector<64x64xbf16>
    %cst_13 = arith.constant dense<0.000000e+00> : vector<8x64xf32>
    %14 = tpu.matmul %12, %13, %cst_13 {dimension_numbers = #tpu.dot_dimension_numbers<[1], [0], [0], [1], [0, 0, 1, 1], [], []>} : vector<8x64xbf16>, vector<64x64xbf16>, vector<8x64xf32> -> vector<8x64xf32>
    %c0_14 = arith.constant 0 : index
    %c0_15 = arith.constant 0 : index
    %15 = vector.load %arg7[%c0_14, %c0_15] : memref<1x64xf32, #tpu.memory_space<vmem>>, vector<1x64xf32>
    %16 = vector.broadcast %15 : vector<1x64xf32> to vector<8x64xf32>
    %17 = arith.addf %14, %16 : vector<8x64xf32>
    %cst_16 = arith.constant 0.000000e+00 : f32
    %18 = vector.broadcast %cst_16 : f32 to vector<8x64xf32>
    %19 = arith.maximumf %17, %18 : vector<8x64xf32>
    %20 = arith.truncf %19 : vector<8x64xf32> to vector<8x64xbf16>
    %c0_17 = arith.constant 0 : index
    %c0_18 = arith.constant 0 : index
    %21 = vector.load %arg8[%c0_17, %c0_18] : memref<64x128xbf16, #tpu.memory_space<vmem>>, vector<64x128xbf16>
    %cst_19 = arith.constant dense<0.000000e+00> : vector<8x128xf32>
    %22 = tpu.matmul %20, %21, %cst_19 {dimension_numbers = #tpu.dot_dimension_numbers<[1], [0], [0], [1], [0, 0, 1, 1], [], []>} : vector<8x64xbf16>, vector<64x128xbf16>, vector<8x128xf32> -> vector<8x128xf32>
    %c0_20 = arith.constant 0 : index
    %c0_21 = arith.constant 0 : index
    %23 = vector.load %arg9[%c0_20, %c0_21] : memref<1x128xf32, #tpu.memory_space<vmem>>, vector<1x128xf32>
    %24 = vector.broadcast %23 : vector<1x128xf32> to vector<8x128xf32>
    %25 = arith.addf %22, %24 : vector<8x128xf32>
    %26 = vector.extract_strided_slice %25 {offsets = [0, 0], sizes = [8, 3], strides = [1, 1]} : vector<8x128xf32> to vector<8x3xf32>
    %c0_22 = arith.constant 0 : index
    %c0_23 = arith.constant 0 : index
    %27 = vector.load %arg10[%c0_22, %c0_23] : memref<8x3xf32, #tpu.memory_space<vmem>>, vector<8x3xf32>
    tpu.vector_store %arg10[%c0_22, %c0_23], %26 {strides = array<i32>} : memref<8x3xf32, #tpu.memory_space<vmem>>, vector<8x3xf32>,
    return
  }
  func.func @transform_0(%arg0: i32) -> (i32, i32) {
    %c0_i32 = arith.constant 0 : i32
    %c0_i32_0 = arith.constant 0 : i32
    return %arg0, %c0_i32 : i32, i32
  }
  func.func @transform_1(%arg0: i32) -> (i32, i32) {
    %c0_i32 = arith.constant 0 : i32
    %c0_i32_0 = arith.constant 0 : i32
    return %arg0, %c0_i32 : i32, i32
  }
  func.func @transform_2(%arg0: i32) -> (i32, i32) {
    %c0_i32 = arith.constant 0 : i32
    %c0_i32_0 = arith.constant 0 : i32
    %c0_i32_1 = arith.constant 0 : i32
    return %c0_i32, %c0_i32_0 : i32, i32
  }
  func.func @transform_3(%arg0: i32) -> (i32, i32) {
    %c0_i32 = arith.constant 0 : i32
    %c0_i32_0 = arith.constant 0 : i32
    %c0_i32_1 = arith.constant 0 : i32
    return %c0_i32, %c0_i32_0 : i32, i32
  }
  func.func @transform_4(%arg0: i32) -> (i32, i32) {
    %c0_i32 = arith.constant 0 : i32
    %c0_i32_0 = arith.constant 0 : i32
    %c0_i32_1 = arith.constant 0 : i32
    return %c0_i32, %c0_i32_0 : i32, i32
  }
  func.func @transform_5(%arg0: i32) -> (i32, i32) {
    %c0_i32 = arith.constant 0 : i32
    %c0_i32_0 = arith.constant 0 : i32
    %c0_i32_1 = arith.constant 0 : i32
    return %c0_i32, %c0_i32_0 : i32, i32
  }
  func.func @transform_6(%arg0: i32) -> (i32, i32) {
    %c0_i32 = arith.constant 0 : i32
    %c0_i32_0 = arith.constant 0 : i32
    %c0_i32_1 = arith.constant 0 : i32
    return %c0_i32, %c0_i32_0 : i32, i32
  }
  func.func @transform_7(%arg0: i32) -> (i32, i32) {
    %c0_i32 = arith.constant 0 : i32
    %c0_i32_0 = arith.constant 0 : i32
    %c0_i32_1 = arith.constant 0 : i32
    return %c0_i32, %c0_i32_0 : i32, i32
  }
  func.func @transform_8(%arg0: i32) -> (i32, i32) {
    %c0_i32 = arith.constant 0 : i32
    %c0_i32_0 = arith.constant 0 : i32
    %c0_i32_1 = arith.constant 0 : i32
    return %c0_i32, %c0_i32_0 : i32, i32
  }
  func.func @transform_9(%arg0: i32) -> (i32, i32) {
    %c0_i32 = arith.constant 0 : i32
    %c0_i32_0 = arith.constant 0 : i32
    return %arg0, %c0_i32 : i32, i32
  }
}

</mosaic_0001>

<llo_original>
// kernel: tpu_custom_call.1
$region0: #{tpu_custom_call.1}
  #allocation0 [shape = 'u32[]', space=smem, size = 0x4, offset = 0x4, fixed_abs, tag = 'smem constant byte address 0x4 - core index']
  #allocation1 [shape = 'u32[72,128]{1,0:T(1,128)}', space=vmem, size = 0x9000, scoped, tag = 'internal scratch']
  %s0 = inlined_call_operand.hbm [shape: bf16[8,16], index: 0, kind: input, shape index: {}]
  %s1 = inlined_call_operand.hbm [shape: bf16[8,12], index: 1, kind: input, shape index: {}]
  %s2 = inlined_call_operand.hbm [shape: bf16[16,64], index: 2, kind: input, shape index: {}]
  %s3 = inlined_call_operand.hbm [shape: bf16[12,64], index: 3, kind: input, shape index: {}]
  %s4 = inlined_call_operand.vmem [shape: f32[1,64], index: 4, kind: input, shape index: {}]
  %s5 = inlined_call_operand.hbm [shape: bf16[64,64], index: 5, kind: input, shape index: {}]
  %s6 = inlined_call_operand.vmem [shape: f32[1,64], index: 6, kind: input, shape index: {}]
  %s7 = inlined_call_operand.hbm [shape: bf16[64,128], index: 7, kind: input, shape index: {}]
  %s8 = inlined_call_operand.vmem [shape: f32[1,128], index: 8, kind: input, shape index: {}]
  %s9 = inlined_call_operand.vmem [shape: f32[8,3], index: 9, kind: output, shape index: {}]
  %s10 = sld [smem:[#allocation0]]
  $region70: #{tpu_custom_call.1} parent=0
    _
  %s12 = ssub.s32 1, %s10
  %s13 = scalar_select 0, %s12, %s10
  $region1: #{tpu_custom_call.1} parent=0
    #allocation2 [shape = 'u8[2048]{0}', space=vmem, size = 0x800, scoped, tag = 'input window, operand 0, single buffered']
    #allocation3 [shape = 's32[1]{0}', space=sflag, size = 0x4, scoped, tag = 'scoped memory for tpu_custom_call.1']
    #allocation4 [shape = 'u8[2048]{0}', space=vmem, size = 0x800, scoped, tag = 'input window, operand 1, single buffered']
    #allocation5 [shape = 's32[1]{0}', space=sflag, size = 0x4, scoped, tag = 'scoped memory for tpu_custom_call.1']
    #allocation6 [shape = 'u8[4096]{0}', space=vmem, size = 0x1000, scoped, tag = 'input window, operand 2, single buffered']
    #allocation7 [shape = 'u8[4096]{0}', space=vmem, size = 0x1000, scoped, tag = 'input window, operand 3, single buffered']
    #allocation8 [shape = 's32[1]{0}', space=sflag, size = 0x4, scoped, tag = 'scoped memory for tpu_custom_call.1']
    #allocation9 [shape = 'u8[16384]{0}', space=vmem, size = 0x4000, scoped, tag = 'input window, operand 5, single buffered']
    #allocation10 [shape = 'u8[16384]{0}', space=vmem, size = 0x4000, scoped, tag = 'input window, operand 7, single buffered']
    #allocation11 [shape = 's32[1]{0}', space=sflag, size = 0x4, scoped, tag = 'scoped memory for tpu_custom_call.1']
    %14 = vsyncpa [#allocation3], 0
    %15 = vsyncpa [#allocation5], 0
    %16 = vsyncpa [#allocation8], 0
    %17 = vsyncpa [#allocation11], 0
    // Predicated region
    $region2: #{tpu_custom_call.1} parent=1 // pred_check
      _
    $region3: #{tpu_custom_call.1} parent=1 // pred_check_branch
      %19 = sbr.rel (0) target = $region5
    $region4: #{tpu_custom_call.1} parent=1 // pred_region
      %21 = vsyncadd [#allocation3], 0
      %s23 = sshll.u32 %s0, 4
      %s24 = int_to_ptr.hbm [resolvable:$true] %s23
      %s25 = sshll.u32 [#allocation2], 4
      %s26 = int_to_ptr.vmem [resolvable:$true] %s25
      %28 = dma.hbm_to_vmem [thread:$0]  %s24, 64, %s26, [#allocation3]
    $region5: #{tpu_custom_call.1} parent=1 // pred_fallthru
      _
    // Predicated region
    $region6: #{tpu_custom_call.1} parent=1 // pred_check
      _
    $region7: #{tpu_custom_call.1} parent=1 // pred_check_branch
      %30 = sbr.rel (0) target = $region9
    $region8: #{tpu_custom_call.1} parent=1 // pred_region
      %32 = vsyncadd [#allocation5], 0
      %s34 = sshll.u32 %s1, 4
      %s35 = int_to_ptr.hbm [resolvable:$true] %s34
      %s36 = sshll.u32 [#allocation4], 4
      %s37 = int_to_ptr.vmem [resolvable:$true] %s36
      %39 = dma.hbm_to_vmem [thread:$0]  %s35, 64, %s37, [#allocation5]
    $region9: #{tpu_custom_call.1} parent=1 // pred_fallthru
      _
    // Predicated region
    $region10: #{tpu_custom_call.1} parent=1 // pred_check
      _
    $region11: #{tpu_custom_call.1} parent=1 // pred_check_branch
      %41 = sbr.rel (0) target = $region13
    $region12: #{tpu_custom_call.1} parent=1 // pred_region
      %43 = vsyncadd [#allocation5], 0
      %s44 = sshll.u32 %s2, 4
      %s45 = int_to_ptr.hbm [resolvable:$true] %s44
      %s46 = sshll.u32 [#allocation6], 4
      %s47 = int_to_ptr.vmem [resolvable:$true] %s46
      %52 = dma.hbm_to_vmem [thread:$0]  %s45, 128, %s47, [#allocation5], 64, 64, 4
    $region13: #{tpu_custom_call.1} parent=1 // pred_fallthru
      _
    // Predicated region
    $region14: #{tpu_custom_call.1} parent=1 // pred_check
      _
    $region15: #{tpu_custom_call.1} parent=1 // pred_check_branch
      %54 = sbr.rel (0) target = $region17
    $region16: #{tpu_custom_call.1} parent=1 // pred_region
      %56 = vsyncadd [#allocation8], 0
      %s57 = sshll.u32 %s3, 4
      %s58 = int_to_ptr.hbm [resolvable:$true] %s57
      %s59 = sshll.u32 [#allocation7], 4
      %s60 = int_to_ptr.vmem [resolvable:$true] %s59
      %65 = dma.hbm_to_vmem [thread:$0]  %s58, 128, %s60, [#allocation8], 64, 64, 4
    $region17: #{tpu_custom_call.1} parent=1 // pred_fallthru
      _
    // Predicated region
    $region18: #{tpu_custom_call.1} parent=1 // pred_check
      _
    $region19: #{tpu_custom_call.1} parent=1 // pred_check_branch
      %67 = sbr.rel (0) target = $region21
    $region20: #{tpu_custom_call.1} parent=1 // pred_region
      _
    $region21: #{tpu_custom_call.1} parent=1 // pred_fallthru
      _
    // Predicated region
    $region22: #{tpu_custom_call.1} parent=1 // pred_check
      _
    $region23: #{tpu_custom_call.1} parent=1 // pred_check_branch
      %69 = sbr.rel (0) target = $region25
    $region24: #{tpu_custom_call.1} parent=1 // pred_region
      %71 = vsyncadd [#allocation8], 0
      %s72 = sshll.u32 %s5, 4
      %s73 = int_to_ptr.hbm [resolvable:$true] %s72
      %s74 = sshll.u32 [#allocation9], 4
      %s75 = int_to_ptr.vmem [resolvable:$true] %s74
      %80 = dma.hbm_to_vmem [thread:$0]  %s73, 512, %s75, [#allocation8], 64, 64, 4
    $region25: #{tpu_custom_call.1} parent=1 // pred_fallthru
      _
    // Predicated region
    $region26: #{tpu_custom_call.1} parent=1 // pred_check
      _
    $region27: #{tpu_custom_call.1} parent=1 // pred_check_branch
      %82 = sbr.rel (0) target = $region29
    $region28: #{tpu_custom_call.1} parent=1 // pred_region
      _
    $region29: #{tpu_custom_call.1} parent=1 // pred_fallthru
      _
    // Predicated region
    $region30: #{tpu_custom_call.1} parent=1 // pred_check
      _
    $region31: #{tpu_custom_call.1} parent=1 // pred_check_branch
      %84 = sbr.rel (0) target = $region33
    $region32: #{tpu_custom_call.1} parent=1 // pred_region
      %86 = vsyncadd [#allocation11], 0
      %s87 = sshll.u32 %s7, 4
      %s88 = int_to_ptr.hbm [resolvable:$true] %s87
      %s89 = sshll.u32 [#allocation10], 4
      %s90 = int_to_ptr.vmem [resolvable:$true] %s89
      %95 = dma.hbm_to_vmem [thread:$0]  %s88, 512, %s90, [#allocation11], 64, 64, 4
    $region33: #{tpu_custom_call.1} parent=1 // pred_fallthru
      _
    // Predicated region
    $region34: #{tpu_custom_call.1} parent=1 // pred_check
      _
    $region35: #{tpu_custom_call.1} parent=1 // pred_check_branch
      %97 = sbr.rel (0) target = $region37
    $region36: #{tpu_custom_call.1} parent=1 // pred_region
      _
    $region37: #{tpu_custom_call.1} parent=1 // pred_fallthru
      _
    // Predicated region
    $region38: #{tpu_custom_call.1} parent=1 // pred_check
      _
    $region39: #{tpu_custom_call.1} parent=1 // pred_check_branch
      %99 = sbr.rel (0) target = $region41
    $region40: #{tpu_custom_call.1} parent=1 // pred_region
      %101 = dma.done [#allocation3], 64
    $region41: #{tpu_custom_call.1} parent=1 // pred_fallthru
      _
    // Predicated region
    $region42: #{tpu_custom_call.1} parent=1 // pred_check
      _
    $region43: #{tpu_custom_call.1} parent=1 // pred_check_branch
      %103 = sbr.rel (0) target = $region45
    $region44: #{tpu_custom_call.1} parent=1 // pred_region
      %105 = dma.done [#allocation5], 64
    $region45: #{tpu_custom_call.1} parent=1 // pred_fallthru
      _
    // Predicated region
    $region46: #{tpu_custom_call.1} parent=1 // pred_check
      _
    $region47: #{tpu_custom_call.1} parent=1 // pred_check_branch
      %107 = sbr.rel (0) target = $region49
    $region48: #{tpu_custom_call.1} parent=1 // pred_region
      %109 = dma.done [#allocation5], 128
    $region49: #{tpu_custom_call.1} parent=1 // pred_fallthru
      _
    // Predicated region
    $region50: #{tpu_custom_call.1} parent=1 // pred_check
      _
    $region51: #{tpu_custom_call.1} parent=1 // pred_check_branch
      %111 = sbr.rel (0) target = $region53
    $region52: #{tpu_custom_call.1} parent=1 // pred_region
      %113 = dma.done [#allocation8], 128
    $region53: #{tpu_custom_call.1} parent=1 // pred_fallthru
      _
    // Predicated region
    $region54: #{tpu_custom_call.1} parent=1 // pred_check
      _
    $region55: #{tpu_custom_call.1} parent=1 // pred_check_branch
      %115 = sbr.rel (0) target = $region57
    $region56: #{tpu_custom_call.1} parent=1 // pred_region
      %117 = dma.done [#allocation8], 512
    $region57: #{tpu_custom_call.1} parent=1 // pred_fallthru
      _
    // Predicated region
    $region58: #{tpu_custom_call.1} parent=1 // pred_check
      _
    $region59: #{tpu_custom_call.1} parent=1 // pred_check_branch
      %119 = sbr.rel (0) target = $region61
    $region60: #{tpu_custom_call.1} parent=1 // pred_region
      %121 = dma.done [#allocation11], 512
    $region61: #{tpu_custom_call.1} parent=1 // pred_fallthru
      _
    %v123 = vld [vmem:[#allocation2] sm:$0xf]
    %v124 = vld [vmem:[#allocation6] sm:$0xf]
    %v125 = vld [vmem:[#allocation6 + $0x4] sm:$0xf]
    %v126 = vld [vmem:[#allocation4] sm:$0xf]
    %v127 = vld [vmem:[#allocation7] sm:$0xf]
    %v128 = vld [vmem:[#allocation7 + $0x4] sm:$0x3]
    %v131 = vunpack.c.l.b16 %v127
    %v132 = vunpack.c.l.b16 %v128
    %v133 = vpack.c.b16 %v132, %v131
    %vm134 = vcmask 97280
    %v136 = vsel %vm134, %v126, 0
    %vm138 = vcmask 1045504
    %v140 = vsel %vm138, %v133, 0
    %142 = vmatpush.bf16.msra.mxu0 0
    %143 = vmatpush.bf16.msra.mxu0 0
    %144 = vmatpush.bf16.msra.mxu0 0
    %145 = vmatpush.bf16.msra.mxu0 0
    %146 = vmatpush.bf16.msra.mxu0 0
    %147 = vmatpush.bf16.msra.mxu0 0
    %148 = vmatpush.bf16.msra.mxu0 0
    %149 = vmatpush.bf16.msra.mxu0 %v140
    %150 = vmatmul.bf16.gmra.mxu0 %v136
    %v151 = vpop.f32.mrf.mxu0
    %v152 = vadd.f32 0.0, %v151
    %v153 = vpop.f32.mrf.mxu0
    %154 = vdwg.mxu0
    %v157 = vunpack.c.l.b16 %v124
    %v158 = vunpack.c.l.b16 %v125
    %v159 = vpack.c.b16 %v158, %v157
    %vm161 = vcmask 130048
    %v163 = vsel %vm161, %v123, 0
    %165 = vmatpush.bf16.msra.mxu0 0
    %166 = vmatpush.bf16.msra.mxu0 0
    %167 = vmatpush.bf16.msra.mxu0 0
    %168 = vmatpush.bf16.msra.mxu0 0
    %169 = vmatpush.bf16.msra.mxu0 0
    %170 = vmatpush.bf16.msra.mxu0 0
    %171 = vmatpush.bf16.msra.mxu0 0
    %172 = vmatpush.bf16.msra.mxu0 %v159
    %173 = vmatmul.bf16.gmra.mxu0 %v163
    %v174 = vpop.f32.mrf.mxu0
    %v175 = vadd.f32 %v152, %v174
    %v176 = vpop.f32.mrf.mxu0
    %177 = vdwg.mxu0
    %v178 = vld [vmem:[%s4] sm:$0x1]
    %v180 = vperm.slane %v178, 0
    %v182 = vadd.f32 %v175, %v180
    %v183 = vmax.f32 %v182, 0.0
    %v184 = vpack.c.bf16 %v183, %v183
    %v185 = vld [vmem:[#allocation9] sm:$0xf]
    %v186 = vld [vmem:[#allocation9 + $0x4] sm:$0xf]
    %v187 = vld [vmem:[#allocation9 + $0x8] sm:$0xf]
    %v188 = vld [vmem:[#allocation9 + $0xc] sm:$0xf]
    %v189 = vld [vmem:[#allocation9 + $0x10] sm:$0xf]
    %v190 = vld [vmem:[#allocation9 + $0x14] sm:$0xf]
    %v191 = vld [vmem:[#allocation9 + $0x18] sm:$0xf]
    %v192 = vld [vmem:[#allocation9 + $0x1c] sm:$0xf]
    %v193 = vld [vmem:[%s6] sm:$0x1]
    %v195 = vperm.slane %v193, 0
    %v205 = vunpack.c.l.b16 %v185
    %v206 = vunpack.c.l.b16 %v186
    %v207 = vunpack.c.l.b16 %v187
    %v208 = vunpack.c.l.b16 %v188
    %v209 = vunpack.c.l.b16 %v189
    %v210 = vunpack.c.l.b16 %v190
    %v211 = vunpack.c.l.b16 %v191
    %v212 = vunpack.c.l.b16 %v192
    %v213 = vpack.c.b16 %v206, %v205
    %v214 = vpack.c.b16 %v208, %v207
    %v215 = vpack.c.b16 %v210, %v209
    %v216 = vpack.c.b16 %v212, %v211
    %vm221 = vcmask 523264
    %v223 = vsel %vm221, %v184, 0
    %225 = vmatpush.bf16.msra.mxu0 0
    %226 = vmatpush.bf16.msra.mxu0 0
    %227 = vmatpush.bf16.msra.mxu0 0
    %228 = vmatpush.bf16.msra.mxu0 0
    %229 = vmatpush.bf16.msra.mxu0 %v216
    %230 = vmatpush.bf16.msra.mxu0 %v215
    %231 = vmatpush.bf16.msra.mxu0 %v214
    %232 = vmatpush.bf16.msra.mxu0 %v213
    %233 = vmatmul.bf16.gmra.mxu0 %v223
    %v234 = vpop.f32.mrf.mxu0
    %v235 = vadd.f32 %v195, %v234
    %v236 = vpop.f32.mrf.mxu0
    %237 = vdwg.mxu0
    %v238 = vmax.f32 %v235, 0.0
    %v239 = vpack.c.bf16 %v238, %v238
    %v240 = vld [vmem:[#allocation10] sm:$0xf]
    %v241 = vld [vmem:[#allocation10 + $0x4] sm:$0xf]
    %v242 = vld [vmem:[#allocation10 + $0x8] sm:$0xf]
    %v243 = vld [vmem:[#allocation10 + $0xc] sm:$0xf]
    %v244 = vld [vmem:[#allocation10 + $0x10] sm:$0xf]
    %v245 = vld [vmem:[#allocation10 + $0x14] sm:$0xf]
    %v246 = vld [vmem:[#allocation10 + $0x18] sm:$0xf]
    %v247 = vld [vmem:[#allocation10 + $0x1c] sm:$0xf]
    %v248 = vld [vmem:[%s8] sm:$0x1]
    %v250 = vperm.slane %v248, 0
    %v260 = vunpack.c.l.b16 %v240
    %v261 = vunpack.c.l.b16 %v241
    %v262 = vunpack.c.l.b16 %v242
    %v263 = vunpack.c.l.b16 %v243
    %v264 = vunpack.c.l.b16 %v244
    %v265 = vunpack.c.l.b16 %v245
    %v266 = vunpack.c.l.b16 %v246
    %v267 = vunpack.c.l.b16 %v247
    %v268 = vpack.c.b16 %v261, %v260
    %v269 = vpack.c.b16 %v263, %v262
    %v270 = vpack.c.b16 %v265, %v264
    %v271 = vpack.c.b16 %v267, %v266
    %v277 = vsel %vm221, %v239, 0
    %279 = vmatpush.bf16.msra.mxu0 0
    %280 = vmatpush.bf16.msra.mxu0 0
    %281 = vmatpush.bf16.msra.mxu0 0
    %282 = vmatpush.bf16.msra.mxu0 0
    %283 = vmatpush.bf16.msra.mxu0 %v271
    %284 = vmatpush.bf16.msra.mxu0 %v270
    %285 = vmatpush.bf16.msra.mxu0 %v269
    %286 = vmatpush.bf16.msra.mxu0 %v268
    %287 = vmatmul.bf16.gmra.mxu0 %v277
    %v288 = vpop.f32.mrf.mxu0
    %v289 = vadd.f32 %v250, %v288
    %v290 = vpop.f32.mrf.mxu0
    %291 = vdwg.mxu0
    %vm292 = vcmask 23552
    %293 = vst.msk [vmem:[%s9] sm:$0xff] %vm292, %v289
    // Predicated region
    $region62: #{tpu_custom_call.1} parent=1 // pred_check
      _
    $region63: #{tpu_custom_call.1} parent=1 // pred_check_branch
      %295 = sbr.rel (0) target = $region65
    $region64: #{tpu_custom_call.1} parent=1 // pred_region
      _
    $region65: #{tpu_custom_call.1} parent=1 // pred_fallthru
      _
    // Predicated region
    $region66: #{tpu_custom_call.1} parent=1 // pred_check
      _
    $region67: #{tpu_custom_call.1} parent=1 // pred_check_branch
      %297 = sbr.rel (0) target = $region69
    $region68: #{tpu_custom_call.1} parent=1 // pred_region
      _
    $region69: #{tpu_custom_call.1} parent=1 // pred_fallthru
      _
    %298 = vsyncpa [#allocation3], 1
    %299 = vsyncpa [#allocation5], 1
    %300 = vsyncpa [#allocation8], 1
    %301 = vsyncpa [#allocation11], 1

</llo_original>
